<compile_context>
chip_gen: v5e
topology: v5e:2x2
jax: 0.10.0
libtpu: 0.0.40
codegen_flags: <defaults>
</compile_context>

<pallas_src>
import jax
import jax.numpy as jnp
from jax.experimental import pallas as pl
from jax.experimental.pallas import tpu as pltpu


def _round_up(x: int, m: int) -> int:
    return (x + m - 1) // m * m


def _cdiv(a: int, b: int) -> int:
    return (a + b - 1) // b


def _pad2(a, rows: int, cols: int):
    return jnp.pad(a, ((0, rows - a.shape[0]), (0, cols - a.shape[1])))


# ----------------------------------------------------------------------------
# Pallas kernel
# ----------------------------------------------------------------------------
def _make_multikr_kernel(n_layer: int, concat_first: str):
    """Fused MultiKR tower kernel.

    concat_first == 'mlp' : rec path, high_layer = concat(user_mlp_out, item_c)
    concat_first == 'head': kg  path, high_layer = concat(head_c, relation_mlp_out)
    """

    def kernel(mlp_ref, item_ref, head_ref,          # streams        [TB, D]
               wm_ref, bm_ref,                       # low MLP        [D, D], [1, D]
               cw_ref, cb_ref,                       # cross&compress [D, 4], [2, D]
               w1a_ref, w1b_ref, b1_ref,             # tower layer 1 (split for concat)
               w2_ref, b2_ref,                       # tower layer 2
               w3_ref, b3_ref,                       # tower last layer (out padded to 128)
               out_ref):
        # Loop-invariant weight loads hoisted above the (unrolled) n_layer loop.
        wm = wm_ref[...]
        bm = bm_ref[...]
        cw = cw_ref[...]               # [D, 4]; columns = (vv, ev, ve, ee)
        bias_v = cb_ref[0:1, :]        # [1, D]
        bias_e = cb_ref[1:2, :]
        mdt = wm.dtype                 # matmul operand dtype (f32 or bf16)

        # Streams arrive at true embed_dim (and in bf16 when matmul_dtype is bf16);
        # elementwise cross&compress math stays f32 (v5e-safe), f32 accumulation.
        s = mlp_ref[...].astype(jnp.float32)
        item = item_ref[...].astype(jnp.float32)
        head = head_ref[...].astype(jnp.float32)
        tb = item.shape[0]

        for _ in range(n_layer):
            # Low-level MLP on the side stream: Linear + ReLU (dropout = eval identity)
            s = jnp.maximum(
                jnp.dot(s.astype(mdt), wm, preferred_element_type=jnp.float32) + bm,
                0.0)

            # Cross & compress unit. With c[b,i,j] = item[b,i]*head[b,j]:
            #   (c  @ w)[b,i] = item[b,i] * <head[b,:], w>
            #   (c_t@ w)[b,i] = head[b,i] * <item[b,:], w>
            # All four projections ride the MXU as ONE stacked [2*TB,D]@[D,4] pass.
            stacked = jnp.concatenate([head, item], axis=0).astype(mdt)
            p = jnp.dot(stacked, cw, preferred_element_type=jnp.float32)   # [2*TB, 4]
            ph, pi = p[:tb], p[tb:]
            hv = ph[:, 0:1]            # <head, w_vv>
            he = ph[:, 2:3]            # <head, w_ve>
            iv = pi[:, 1:2]            # <item, w_ev>
            ie = pi[:, 3:4]            # <item, w_ee>
            # TODO(synk): on v6e/v7x, consider replicating cw to [D, 4*128] so
            # hv/he/iv/ie come out of the MXU already lane-dense (drops the four
            # per-layer lane broadcasts); verify with a bundle dump that the
            # XLU/VPU slot is actually the binding one first. Keep N=4 on v5e.
            new_item = item * hv + head * iv + bias_v
            new_head = item * he + head * ie + bias_e
            item, head = new_item, new_head

        if concat_first == "mlp":
            a, b = s, item             # rec: concat(user_embed, item_embed)
        else:
            a, b = head, s             # kg : concat(head_embed, relation_embed)

        # High-level tower.  concat(a, b) @ W1 == a @ W1[:D] + b @ W1[D:]
        h = (jnp.dot(a.astype(mdt), w1a_ref[...], preferred_element_type=jnp.float32)
             + jnp.dot(b.astype(mdt), w1b_ref[...], preferred_element_type=jnp.float32)
             + b1_ref[...])
        h = jnp.maximum(h, 0.0)
        h = jnp.maximum(
            jnp.dot(h.astype(mdt), w2_ref[...], preferred_element_type=jnp.float32)
            + b2_ref[...], 0.0)
        # TODO(synk): assumed linear_layer applies ReLU to the final layer too.
        out_ref[...] = jnp.maximum(
            jnp.dot(h.astype(mdt), w3_ref[...], preferred_element_type=jnp.float32)
            + b3_ref[...], 0.0)

    return kernel


def _choose_tiling(batch: int, granule: int, max_rows: int = 1024):
    """Pad batch only to the sublane granule (8 f32 / 16 bf16); aim for >=2 grid
    steps (v7x megacore) and <=max_rows rows/step (amortize ~0.35us/step)."""
    b_pad = _round_up(batch, granule)
    n_tiles = max(2, _cdiv(b_pad, max_rows))
    tile_b = min(_round_up(_cdiv(b_pad, n_tiles), granule), b_pad)
    b_pad = _round_up(b_pad, tile_b)
    return b_pad, tile_b


def _run_tower(mlp_in, item_in, head_in, weights, *, n_layer, concat_first, tile_b):
    """Calls the fused kernel with a batch-tiled grid; weights are resident blocks."""
    (wm, bm, cw, cb, w1a, w1b, b1, w2, b2, w3, b3) = weights
    b_pad, d = mlp_in.shape
    out_pad = w3.shape[1]
    grid = (b_pad // tile_b,)

    # Streams stay at their true feature width: last block dim == full array dim.
    stream_spec = pl.BlockSpec((tile_b, d), lambda i: (i, 0))

    # Grid-invariant resident weight blocks (block index never moves -> fetched once).
    # TODO(synk): on v7x, single-buffer these (pipeline_mode=pl.Buffered(1) or
    # memory_space=pltpu.MemorySpace.VMEM) once single-buffered pipelining is
    # confirmed on the target JAX build; halves resident-weight VMEM at prod dims.
    def full_spec(a):
        return pl.BlockSpec(a.shape, lambda i: (0, 0))

    weight_list = [wm, bm, cw, cb, w1a, w1b, b1, w2, b2, w3, b3]
    in_specs = [stream_spec, stream_spec, stream_spec] + [full_spec(a) for a in weight_list]
    out_spec = pl.BlockSpec((tile_b, out_pad), lambda i: (i, 0))

    # Explicit scoped-VMEM budget with headroom; capped at 64 MiB (v7x-safe).
    stream_bytes = 3 * tile_b * d * mlp_in.dtype.itemsize
    out_bytes = tile_b * out_pad * 4
    weight_bytes = sum(int(a.size) * a.dtype.itemsize for a in weight_list)
    vmem_est = 2 * (stream_bytes + out_bytes + weight_bytes) + (8 << 20)
    vmem_limit = int(min(max(vmem_est, 32 << 20), 64 << 20))

    return pl.pallas_call(
        _make_multikr_kernel(n_layer, concat_first),
        out_shape=jax.ShapeDtypeStruct((b_pad, out_pad), jnp.float32),
        grid=grid,
        in_specs=in_specs,
        out_specs=out_spec,
        compiler_params=pltpu.CompilerParams(
            # batch axis is independent -> shard across TensorCores on v7x.
            dimension_semantics=("parallel",),
            vmem_limit_bytes=vmem_limit),
    )(mlp_in, item_in, head_in, *weight_list)


# ----------------------------------------------------------------------------
# Parameter construction + model wrapper (glue, plain JAX)
# ----------------------------------------------------------------------------
def init_multikr_params(key, user_num, item_num, entity_num, relation_num,
                        embed_dim, hidden_layers, output_rec):
    ks = list(jax.random.split(key, 40))

    def nxt():
        return ks.pop()

    def dense(in_f, out_f):
        w = jax.random.normal(nxt(), (in_f, out_f), jnp.float32) * 0.1
        b = jax.random.normal(nxt(), (1, out_f), jnp.float32) * 0.1
        return w, b

    params = {}
    params["user_embed"] = jax.random.normal(nxt(), (user_num, embed_dim)) * 0.01
    params["item_embed"] = jax.random.normal(nxt(), (item_num, embed_dim)) * 0.01
    params["entity_embed"] = jax.random.normal(nxt(), (entity_num, embed_dim)) * 0.01
    params["relation_embed"] = jax.random.normal(nxt(), (relation_num, embed_dim)) * 0.01

    # cross&compress weights packed as [D, 4]; columns = (vv, ev, ve, ee)
    params["compress_w"] = jax.random.uniform(nxt(), (embed_dim, 4), jnp.float32)
    params["compress_b"] = jax.random.uniform(nxt(), (2,), jnp.float32)  # (bias_v, bias_e)

    params["user_mlp"] = dense(embed_dim, embed_dim)
    params["relation_mlp"] = dense(embed_dim, embed_dim)

    layers = [2 * embed_dim] + list(hidden_layers)

    def tower(out_last):
        ws = [dense(layers[i], layers[i + 1]) for i in range(len(layers) - 1)]
        ws.append(dense(layers[-1], out_last))
        return ws

    params["rec_layers"] = tower(output_rec)
    params["kg_layers"] = tower(embed_dim)
    return params


class MultiKRPallas:
    def __init__(self, params, n_layer, embed_dim, matmul_dtype=jnp.float32):
        self.p = params
        self.n_layer = n_layer
        self.embed_dim = embed_dim
        self.matmul_dtype = matmul_dtype
        # bf16 streams when bf16 matmuls: halves the dominant stream DMA traffic.
        # TODO(synk): store the embedding tables in bf16 so the gather emits bf16
        # directly and the wrapper-side cast pass disappears.
        self.stream_dtype = jnp.bfloat16 if matmul_dtype == jnp.bfloat16 else jnp.float32

        d = embed_dim
        mdt = matmul_dtype

        def prep_mlp(wb):
            w, b = wb
            return (w.astype(mdt), b.astype(jnp.float32))

        self._user_mlp = prep_mlp(params["user_mlp"])
        self._relation_mlp = prep_mlp(params["relation_mlp"])

        self._cw = params["compress_w"].astype(mdt)                          # [D, 4]
        self._cb = jnp.broadcast_to(params["compress_b"][:, None],
                                    (2, d)).astype(jnp.float32)             # [2, D]

        def prep_tower(tower):
            assert len(tower) == 3, "kernel is specialised for 2 hidden layers + output"
            (w1, b1), (w2, b2), (w3, b3) = tower
            out = w3.shape[1]
            outp = _round_up(out, 128)   # lane-dense stores; sliced back in the wrapper
            return (out,
                    w1[:d, :].astype(mdt), w1[d:, :].astype(mdt),
                    b1.astype(jnp.float32),
                    w2.astype(mdt), b2.astype(jnp.float32),
                    _pad2(w3, w3.shape[0], outp).astype(mdt),
                    _pad2(b3, 1, outp).astype(jnp.float32))

        self._rec_tower = prep_tower(params["rec_layers"])
        self._kg_tower = prep_tower(params["kg_layers"])

    def _prep_streams(self, *streams):
        batch = streams[0].shape[0]
        granule = 16 if self.stream_dtype == jnp.bfloat16 else 8
        b_pad, tile_b = _choose_tiling(batch, granule)
        prepped = []
        for s in streams:
            s = s.astype(self.stream_dtype)            # true embed_dim, no lane pad
            if b_pad != batch:
                s = jnp.pad(s, ((0, b_pad - batch), (0, 0)))
            prepped.append(s)
        return tuple(prepped), tile_b

    def _call(self, mlp_in, item_in, head_in, mlp_params, tower, concat_first):
        batch = mlp_in.shape[0]
        (mlp_p, item_p, head_p), tile_b = self._prep_streams(mlp_in, item_in, head_in)
        out_dim = tower[0]
        weights = mlp_params + (self._cw, self._cb) + tower[1:]
        out = _run_tower(mlp_p, item_p, head_p, weights,
                         n_layer=self.n_layer, concat_first=concat_first,
                         tile_b=tile_b)
        return out[:batch, :out_dim]

    def forward(self, data, train_type):
        p = self.p
        # TODO(synk): embedding gathers stay in plain JAX; fusing them (scalar-prefetch
        # indices + per-row DMA from pl.ANY tables) only pays once rows are large
        # enough to amortise the per-row DMA cost.
        if train_type == "rec":
            user_e = p["user_embed"][data[0].astype(jnp.int32)]
            item_e = p["item_embed"][data[1].astype(jnp.int32)]
            head_e = p["entity_embed"][data[1].astype(jnp.int32)]
            rec_target = data[2].astype(jnp.float32)
            rec_out = self._call(user_e, item_e, head_e,
                                 self._user_mlp, self._rec_tower, "mlp")
            return jnp.squeeze(rec_out), rec_target
        else:
            head_e = p["entity_embed"][data[0].astype(jnp.int32)]
            item_e = p["item_embed"][data[0].astype(jnp.int32)]
            rel_e = p["relation_embed"][data[1].astype(jnp.int32)]
            tail_e = p["entity_embed"][data[2].astype(jnp.int32)]
            tail_out = self._call(rel_e, item_e, head_e,
                                  self._relation_mlp, self._kg_tower, "head")
            return tail_out, tail_e


# ----------------------------------------------------------------------------
# Pure-JAX reference (mirrors the PyTorch forward) for correctness checking
# ----------------------------------------------------------------------------
def _ref_tower(mlp_in, item, head, wm, bm, cw, cb, tower, n_layer, concat_first):
    s = mlp_in
    w_vv, w_ev, w_ve, w_ee = cw[:, 0], cw[:, 1], cw[:, 2], cw[:, 3]
    bv, be = cb[0], cb[1]
    for _ in range(n_layer):
        s = jnp.maximum(s @ wm + bm, 0.0)
        c = item[:, :, None] * head[:, None, :]
        c_t = head[:, :, None] * item[:, None, :]
        new_item = (c @ w_vv[:, None])[..., 0] + (c_t @ w_ev[:, None])[..., 0] + bv
        new_head = (c @ w_ve[:, None])[..., 0] + (c_t @ w_ee[:, None])[..., 0] + be
        item, head = new_item, new_head
    high = jnp.concatenate([s, item] if concat_first == "mlp" else [head, s], axis=1)
    h = high
    for (w, b) in tower:
        h = jnp.maximum(h @ w + b, 0.0)
    return h


# ----------------------------------------------------------------------------
if __name__ == "__main__":
    # Small, forward-consistent config
    user_num, item_num, entity_num, relation_num = 10, 12, 12, 5
    n_layer, embed_dim = 2, 32
    hidden_layers, dropouts, output_rec = [64, 32], [0.5, 0.5], 1
    batch = 8

    key = jax.random.PRNGKey(0)
    pkey, dkey = jax.random.split(key)
    params = init_multikr_params(pkey, user_num, item_num, entity_num,
                                 relation_num, embed_dim, hidden_layers,
                                 output_rec)
    # f32 here so the strict correctness check is meaningful; the bf16 path is
    # exercised separately below with a looser tolerance.
    model = MultiKRPallas(params, n_layer, embed_dim, matmul_dtype=jnp.float32)

    k1, k2, k3, k4 = jax.random.split(dkey, 4)
    users = jax.random.randint(k1, (batch,), 0, user_num)
    items = jax.random.randint(k2, (batch,), 0, item_num)
    labels = jax.random.bernoulli(k3, 0.5, (batch,)).astype(jnp.float32)
    relations = jax.random.randint(k4, (batch,), 0, relation_num)
    tails = jax.random.randint(k1, (batch,), 0, entity_num)

    # --- rec path (f32) ---
    rec_out, rec_target = model.forward((users, items, labels), "rec")
    rec_out = jax.block_until_ready(rec_out)

    # --- kg path (f32) ---
    tail_out, tail_embed = model.forward((items, relations, tails), "kg")
    tail_out = jax.block_until_ready(tail_out)

    # reference checks
    p = params
    ref_rec = _ref_tower(
        p["user_embed"][users], p["item_embed"][items], p["entity_embed"][items],
        *p["user_mlp"], p["compress_w"], p["compress_b"],
        p["rec_layers"], n_layer, "mlp").squeeze()
    ref_kg = _ref_tower(
        p["relation_embed"][relations], p["item_embed"][items], p["entity_embed"][items],
        *p["relation_mlp"], p["compress_w"], p["compress_b"],
        p["kg_layers"], n_layer, "head")

    assert jnp.allclose(rec_out, ref_rec, atol=1e-3, rtol=1e-3), \
        float(jnp.max(jnp.abs(rec_out - ref_rec)))
    assert jnp.allclose(tail_out, ref_kg, atol=1e-3, rtol=1e-3), \
        float(jnp.max(jnp.abs(tail_out - ref_kg)))
    assert rec_out.shape == (batch,) and rec_target.shape == (batch,)
    assert tail_out.shape == (batch, embed_dim) and tail_embed.shape == (batch, embed_dim)

    # --- bf16 stream/weight path (production setting; also valid on v5e since its
    #     MXU is natively bf16 and the elementwise math stays f32). Loose tolerance:
    #     bf16 precision compounds through the cross&compress recurrence. ---
    model_bf16 = MultiKRPallas(params, n_layer, embed_dim, matmul_dtype=jnp.bfloat16)
    rec_bf16, _ = model_bf16.forward((users, items, labels), "rec")
    rec_bf16 = jax.block_until_ready(rec_bf16)
    assert bool(jnp.all(jnp.isfinite(rec_bf16)))
    assert jnp.allclose(rec_bf16, ref_rec, atol=0.15, rtol=0.15), \
        float(jnp.max(jnp.abs(rec_bf16 - ref_rec)))

    print("KERNEL_OK")
</pallas_src>

<mosaic_0001>
module attributes {stable_mosaic.version = 11 : i64} {
  func.func @kernel(%arg0: i32, %arg1: memref<8x32xf32, #tpu.memory_space<vmem>>, %arg2: memref<8x32xf32, #tpu.memory_space<vmem>>, %arg3: memref<8x32xf32, #tpu.memory_space<vmem>>, %arg4: memref<32x32xf32, #tpu.memory_space<vmem>>, %arg5: memref<1x32xf32, #tpu.memory_space<vmem>>, %arg6: memref<32x4xf32, #tpu.memory_space<vmem>>, %arg7: memref<2x32xf32, #tpu.memory_space<vmem>>, %arg8: memref<32x64xf32, #tpu.memory_space<vmem>>, %arg9: memref<32x64xf32, #tpu.memory_space<vmem>>, %arg10: memref<1x64xf32, #tpu.memory_space<vmem>>, %arg11: memref<64x32xf32, #tpu.memory_space<vmem>>, %arg12: memref<1x32xf32, #tpu.memory_space<vmem>>, %arg13: memref<32x128xf32, #tpu.memory_space<vmem>>, %arg14: memref<1x128xf32, #tpu.memory_space<vmem>>, %arg15: memref<8x128xf32, #tpu.memory_space<vmem>>) attributes {dimension_semantics = [#tpu.dimension_semantics<parallel>], iteration_bounds = array<i64: 1>, scalar_prefetch = 0 : i64, scratch_operands = 0 : i64, tpu.core_type = #tpu.core_type<tc>, window_params = [{transform_indices = @transform_0, window_bounds = array<i64: 8, 32>}, {transform_indices = @transform_1, window_bounds = array<i64: 8, 32>}, {transform_indices = @transform_2, window_bounds = array<i64: 8, 32>}, {pipeline_mode = #tpu.pipeline_mode<synchronous>, transform_indices = @transform_3, window_bounds = array<i64: 32, 32>}, {pipeline_mode = #tpu.pipeline_mode<synchronous>, transform_indices = @transform_4, window_bounds = array<i64: 1, 32>}, {pipeline_mode = #tpu.pipeline_mode<synchronous>, transform_indices = @transform_5, window_bounds = array<i64: 32, 4>}, {pipeline_mode = #tpu.pipeline_mode<synchronous>, transform_indices = @transform_6, window_bounds = array<i64: 2, 32>}, {pipeline_mode = #tpu.pipeline_mode<synchronous>, transform_indices = @transform_7, window_bounds = array<i64: 32, 64>}, {pipeline_mode = #tpu.pipeline_mode<synchronous>, transform_indices = @transform_8, window_bounds = array<i64: 32, 64>}, {pipeline_mode = #tpu.pipeline_mode<synchronous>, transform_indices = @transform_9, window_bounds = array<i64: 1, 64>}, {pipeline_mode = #tpu.pipeline_mode<synchronous>, transform_indices = @transform_10, window_bounds = array<i64: 64, 32>}, {pipeline_mode = #tpu.pipeline_mode<synchronous>, transform_indices = @transform_11, window_bounds = array<i64: 1, 32>}, {pipeline_mode = #tpu.pipeline_mode<synchronous>, transform_indices = @transform_12, window_bounds = array<i64: 32, 128>}, {pipeline_mode = #tpu.pipeline_mode<synchronous>, transform_indices = @transform_13, window_bounds = array<i64: 1, 128>}, {transform_indices = @transform_14, window_bounds = array<i64: 8, 128>}]} {
    %c0 = arith.constant 0 : index
    %c0_0 = arith.constant 0 : index
    %0 = vector.load %arg4[%c0, %c0_0] : memref<32x32xf32, #tpu.memory_space<vmem>>, vector<32x32xf32>
    %c0_1 = arith.constant 0 : index
    %c0_2 = arith.constant 0 : index
    %1 = vector.load %arg5[%c0_1, %c0_2] : memref<1x32xf32, #tpu.memory_space<vmem>>, vector<1x32xf32>
    %c0_3 = arith.constant 0 : index
    %c0_4 = arith.constant 0 : index
    %2 = vector.load %arg6[%c0_3, %c0_4] : memref<32x4xf32, #tpu.memory_space<vmem>>, vector<32x4xf32>
    %c0_5 = arith.constant 0 : index
    %c0_6 = arith.constant 0 : index
    %3 = vector.load %arg7[%c0_5, %c0_6] : memref<2x32xf32, #tpu.memory_space<vmem>>, vector<1x32xf32>
    %c1 = arith.constant 1 : index
    %c0_7 = arith.constant 0 : index
    %4 = vector.load %arg7[%c1, %c0_7] : memref<2x32xf32, #tpu.memory_space<vmem>>, vector<1x32xf32>
    %c0_8 = arith.constant 0 : index
    %c0_9 = arith.constant 0 : index
    %5 = vector.load %arg1[%c0_8, %c0_9] : memref<8x32xf32, #tpu.memory_space<vmem>>, vector<8x32xf32>
    %c0_10 = arith.constant 0 : index
    %c0_11 = arith.constant 0 : index
    %6 = vector.load %arg2[%c0_10, %c0_11] : memref<8x32xf32, #tpu.memory_space<vmem>>, vector<8x32xf32>
    %c0_12 = arith.constant 0 : index
    %c0_13 = arith.constant 0 : index
    %7 = vector.load %arg3[%c0_12, %c0_13] : memref<8x32xf32, #tpu.memory_space<vmem>>, vector<8x32xf32>
    %cst = arith.constant dense<0.000000e+00> : vector<8x32xf32>
    %8 = tpu.matmul %5, %0, %cst {dimension_numbers = #tpu.dot_dimension_numbers<[1], [0], [0], [1], [0, 0, 1, 1], [], []>} : vector<8x32xf32>, vector<32x32xf32>, vector<8x32xf32> -> vector<8x32xf32>
    %9 = vector.broadcast %1 : vector<1x32xf32> to vector<8x32xf32>
    %10 = arith.addf %8, %9 : vector<8x32xf32>
    %cst_14 = arith.constant 0.000000e+00 : f32
    %11 = vector.broadcast %cst_14 : f32 to vector<8x32xf32>
    %12 = arith.maximumf %10, %11 : vector<8x32xf32>
    %13 = tpu.concatenate %7, %6 in 0 : vector<8x32xf32>, vector<8x32xf32> -> vector<16x32xf32>
    %cst_15 = arith.constant dense<0.000000e+00> : vector<16x4xf32>
    %14 = tpu.matmul %13, %2, %cst_15 {dimension_numbers = #tpu.dot_dimension_numbers<[1], [0], [0], [1], [0, 0, 1, 1], [], []>} : vector<16x32xf32>, vector<32x4xf32>, vector<16x4xf32> -> vector<16x4xf32>
    %15 = vector.extract_strided_slice %14 {offsets = [0, 0], sizes = [8, 4], strides = [1, 1]} : vector<16x4xf32> to vector<8x4xf32>
    %16 = vector.extract_strided_slice %14 {offsets = [8, 0], sizes = [8, 4], strides = [1, 1]} : vector<16x4xf32> to vector<8x4xf32>
    %17 = vector.extract_strided_slice %15 {offsets = [0, 0], sizes = [8, 1], strides = [1, 1]} : vector<8x4xf32> to vector<8x1xf32>
    %18 = vector.extract_strided_slice %15 {offsets = [0, 2], sizes = [8, 1], strides = [1, 1]} : vector<8x4xf32> to vector<8x1xf32>
    %19 = vector.extract_strided_slice %16 {offsets = [0, 1], sizes = [8, 1], strides = [1, 1]} : vector<8x4xf32> to vector<8x1xf32>
    %20 = vector.extract_strided_slice %16 {offsets = [0, 3], sizes = [8, 1], strides = [1, 1]} : vector<8x4xf32> to vector<8x1xf32>
    %21 = vector.broadcast %17 : vector<8x1xf32> to vector<8x32xf32>
    %22 = arith.mulf %6, %21 : vector<8x32xf32>
    %23 = vector.broadcast %19 : vector<8x1xf32> to vector<8x32xf32>
    %24 = arith.mulf %7, %23 : vector<8x32xf32>
    %25 = arith.addf %22, %24 : vector<8x32xf32>
    %26 = vector.broadcast %3 : vector<1x32xf32> to vector<8x32xf32>
    %27 = arith.addf %25, %26 : vector<8x32xf32>
    %28 = vector.broadcast %18 : vector<8x1xf32> to vector<8x32xf32>
    %29 = arith.mulf %6, %28 : vector<8x32xf32>
    %30 = vector.broadcast %20 : vector<8x1xf32> to vector<8x32xf32>
    %31 = arith.mulf %7, %30 : vector<8x32xf32>
    %32 = arith.addf %29, %31 : vector<8x32xf32>
    %33 = vector.broadcast %4 : vector<1x32xf32> to vector<8x32xf32>
    %34 = arith.addf %32, %33 : vector<8x32xf32>
    %cst_16 = arith.constant dense<0.000000e+00> : vector<8x32xf32>
    %35 = tpu.matmul %12, %0, %cst_16 {dimension_numbers = #tpu.dot_dimension_numbers<[1], [0], [0], [1], [0, 0, 1, 1], [], []>} : vector<8x32xf32>, vector<32x32xf32>, vector<8x32xf32> -> vector<8x32xf32>
    %36 = vector.broadcast %1 : vector<1x32xf32> to vector<8x32xf32>
    %37 = arith.addf %35, %36 : vector<8x32xf32>
    %cst_17 = arith.constant 0.000000e+00 : f32
    %38 = vector.broadcast %cst_17 : f32 to vector<8x32xf32>
    %39 = arith.maximumf %37, %38 : vector<8x32xf32>
    %40 = tpu.concatenate %34, %27 in 0 : vector<8x32xf32>, vector<8x32xf32> -> vector<16x32xf32>
    %cst_18 = arith.constant dense<0.000000e+00> : vector<16x4xf32>
    %41 = tpu.matmul %40, %2, %cst_18 {dimension_numbers = #tpu.dot_dimension_numbers<[1], [0], [0], [1], [0, 0, 1, 1], [], []>} : vector<16x32xf32>, vector<32x4xf32>, vector<16x4xf32> -> vector<16x4xf32>
    %42 = vector.extract_strided_slice %41 {offsets = [0, 0], sizes = [8, 4], strides = [1, 1]} : vector<16x4xf32> to vector<8x4xf32>
    %43 = vector.extract_strided_slice %41 {offsets = [8, 0], sizes = [8, 4], strides = [1, 1]} : vector<16x4xf32> to vector<8x4xf32>
    %44 = vector.extract_strided_slice %42 {offsets = [0, 0], sizes = [8, 1], strides = [1, 1]} : vector<8x4xf32> to vector<8x1xf32>
    %45 = vector.extract_strided_slice %43 {offsets = [0, 1], sizes = [8, 1], strides = [1, 1]} : vector<8x4xf32> to vector<8x1xf32>
    %46 = vector.broadcast %44 : vector<8x1xf32> to vector<8x32xf32>
    %47 = arith.mulf %27, %46 : vector<8x32xf32>
    %48 = vector.broadcast %45 : vector<8x1xf32> to vector<8x32xf32>
    %49 = arith.mulf %34, %48 : vector<8x32xf32>
    %50 = arith.addf %47, %49 : vector<8x32xf32>
    %51 = vector.broadcast %3 : vector<1x32xf32> to vector<8x32xf32>
    %52 = arith.addf %50, %51 : vector<8x32xf32>
    %c0_19 = arith.constant 0 : index
    %c0_20 = arith.constant 0 : index
    %53 = vector.load %arg8[%c0_19, %c0_20] : memref<32x64xf32, #tpu.memory_space<vmem>>, vector<32x64xf32>
    %cst_21 = arith.constant dense<0.000000e+00> : vector<8x64xf32>
    %54 = tpu.matmul %39, %53, %cst_21 {dimension_numbers = #tpu.dot_dimension_numbers<[1], [0], [0], [1], [0, 0, 1, 1], [], []>} : vector<8x32xf32>, vector<32x64xf32>, vector<8x64xf32> -> vector<8x64xf32>
    %c0_22 = arith.constant 0 : index
    %c0_23 = arith.constant 0 : index
    %55 = vector.load %arg9[%c0_22, %c0_23] : memref<32x64xf32, #tpu.memory_space<vmem>>, vector<32x64xf32>
    %cst_24 = arith.constant dense<0.000000e+00> : vector<8x64xf32>
    %56 = tpu.matmul %52, %55, %cst_24 {dimension_numbers = #tpu.dot_dimension_numbers<[1], [0], [0], [1], [0, 0, 1, 1], [], []>} : vector<8x32xf32>, vector<32x64xf32>, vector<8x64xf32> -> vector<8x64xf32>
    %57 = arith.addf %54, %56 : vector<8x64xf32>
    %c0_25 = arith.constant 0 : index
    %c0_26 = arith.constant 0 : index
    %58 = vector.load %arg10[%c0_25, %c0_26] : memref<1x64xf32, #tpu.memory_space<vmem>>, vector<1x64xf32>
    %59 = vector.broadcast %58 : vector<1x64xf32> to vector<8x64xf32>
    %60 = arith.addf %57, %59 : vector<8x64xf32>
    %cst_27 = arith.constant 0.000000e+00 : f32
    %61 = vector.broadcast %cst_27 : f32 to vector<8x64xf32>
    %62 = arith.maximumf %60, %61 : vector<8x64xf32>
    %c0_28 = arith.constant 0 : index
    %c0_29 = arith.constant 0 : index
    %63 = vector.load %arg11[%c0_28, %c0_29] : memref<64x32xf32, #tpu.memory_space<vmem>>, vector<64x32xf32>
    %cst_30 = arith.constant dense<0.000000e+00> : vector<8x32xf32>
    %64 = tpu.matmul %62, %63, %cst_30 {dimension_numbers = #tpu.dot_dimension_numbers<[1], [0], [0], [1], [0, 0, 1, 1], [], []>} : vector<8x64xf32>, vector<64x32xf32>, vector<8x32xf32> -> vector<8x32xf32>
    %c0_31 = arith.constant 0 : index
    %c0_32 = arith.constant 0 : index
    %65 = vector.load %arg12[%c0_31, %c0_32] : memref<1x32xf32, #tpu.memory_space<vmem>>, vector<1x32xf32>
    %66 = vector.broadcast %65 : vector<1x32xf32> to vector<8x32xf32>
    %67 = arith.addf %64, %66 : vector<8x32xf32>
    %cst_33 = arith.constant 0.000000e+00 : f32
    %68 = vector.broadcast %cst_33 : f32 to vector<8x32xf32>
    %69 = arith.maximumf %67, %68 : vector<8x32xf32>
    %c0_34 = arith.constant 0 : index
    %c0_35 = arith.constant 0 : index
    %70 = vector.load %arg13[%c0_34, %c0_35] : memref<32x128xf32, #tpu.memory_space<vmem>>, vector<32x128xf32>
    %cst_36 = arith.constant dense<0.000000e+00> : vector<8x128xf32>
    %71 = tpu.matmul %69, %70, %cst_36 {dimension_numbers = #tpu.dot_dimension_numbers<[1], [0], [0], [1], [0, 0, 1, 1], [], []>} : vector<8x32xf32>, vector<32x128xf32>, vector<8x128xf32> -> vector<8x128xf32>
    %c0_37 = arith.constant 0 : index
    %c0_38 = arith.constant 0 : index
    %72 = vector.load %arg14[%c0_37, %c0_38] : memref<1x128xf32, #tpu.memory_space<vmem>>, vector<1x128xf32>
    %73 = vector.broadcast %72 : vector<1x128xf32> to vector<8x128xf32>
    %74 = arith.addf %71, %73 : vector<8x128xf32>
    %cst_39 = arith.constant 0.000000e+00 : f32
    %75 = vector.broadcast %cst_39 : f32 to vector<8x128xf32>
    %76 = arith.maximumf %74, %75 : vector<8x128xf32>
    %c0_40 = arith.constant 0 : index
    %c0_41 = arith.constant 0 : index
    %77 = vector.load %arg15[%c0_40, %c0_41] : memref<8x128xf32, #tpu.memory_space<vmem>>, vector<8x128xf32>
    tpu.vector_store %arg15[%c0_40, %c0_41], %76 {strides = array<i32>} : memref<8x128xf32, #tpu.memory_space<vmem>>, vector<8x128xf32>,
    return
  }
  func.func @transform_0(%arg0: i32) -> (i32, i32) {
    %c0_i32 = arith.constant 0 : i32
    %c0_i32_0 = arith.constant 0 : i32
    return %arg0, %c0_i32 : i32, i32
  }
  func.func @transform_1(%arg0: i32) -> (i32, i32) {
    %c0_i32 = arith.constant 0 : i32
    %c0_i32_0 = arith.constant 0 : i32
    return %arg0, %c0_i32 : i32, i32
  }
  func.func @transform_2(%arg0: i32) -> (i32, i32) {
    %c0_i32 = arith.constant 0 : i32
    %c0_i32_0 = arith.constant 0 : i32
    return %arg0, %c0_i32 : i32, i32
  }
  func.func @transform_3(%arg0: i32) -> (i32, i32) {
    %c0_i32 = arith.constant 0 : i32
    %c0_i32_0 = arith.constant 0 : i32
    %c0_i32_1 = arith.constant 0 : i32
    return %c0_i32, %c0_i32_0 : i32, i32
  }
  func.func @transform_4(%arg0: i32) -> (i32, i32) {
    %c0_i32 = arith.constant 0 : i32
    %c0_i32_0 = arith.constant 0 : i32
    %c0_i32_1 = arith.constant 0 : i32
    return %c0_i32, %c0_i32_0 : i32, i32
  }
  func.func @transform_5(%arg0: i32) -> (i32, i32) {
    %c0_i32 = arith.constant 0 : i32
    %c0_i32_0 = arith.constant 0 : i32
    %c0_i32_1 = arith.constant 0 : i32
    return %c0_i32, %c0_i32_0 : i32, i32
  }
  func.func @transform_6(%arg0: i32) -> (i32, i32) {
    %c0_i32 = arith.constant 0 : i32
    %c0_i32_0 = arith.constant 0 : i32
    %c0_i32_1 = arith.constant 0 : i32
    return %c0_i32, %c0_i32_0 : i32, i32
  }
  func.func @transform_7(%arg0: i32) -> (i32, i32) {
    %c0_i32 = arith.constant 0 : i32
    %c0_i32_0 = arith.constant 0 : i32
    %c0_i32_1 = arith.constant 0 : i32
    return %c0_i32, %c0_i32_0 : i32, i32
  }
  func.func @transform_8(%arg0: i32) -> (i32, i32) {
    %c0_i32 = arith.constant 0 : i32
    %c0_i32_0 = arith.constant 0 : i32
    %c0_i32_1 = arith.constant 0 : i32
    return %c0_i32, %c0_i32_0 : i32, i32
  }
  func.func @transform_9(%arg0: i32) -> (i32, i32) {
    %c0_i32 = arith.constant 0 : i32
    %c0_i32_0 = arith.constant 0 : i32
    %c0_i32_1 = arith.constant 0 : i32
    return %c0_i32, %c0_i32_0 : i32, i32
  }
  func.func @transform_10(%arg0: i32) -> (i32, i32) {
    %c0_i32 = arith.constant 0 : i32
    %c0_i32_0 = arith.constant 0 : i32
    %c0_i32_1 = arith.constant 0 : i32
    return %c0_i32, %c0_i32_0 : i32, i32
  }
  func.func @transform_11(%arg0: i32) -> (i32, i32) {
    %c0_i32 = arith.constant 0 : i32
    %c0_i32_0 = arith.constant 0 : i32
    %c0_i32_1 = arith.constant 0 : i32
    return %c0_i32, %c0_i32_0 : i32, i32
  }
  func.func @transform_12(%arg0: i32) -> (i32, i32) {
    %c0_i32 = arith.constant 0 : i32
    %c0_i32_0 = arith.constant 0 : i32
    %c0_i32_1 = arith.constant 0 : i32
    return %c0_i32, %c0_i32_0 : i32, i32
  }
  func.func @transform_13(%arg0: i32) -> (i32, i32) {
    %c0_i32 = arith.constant 0 : i32
    %c0_i32_0 = arith.constant 0 : i32
    %c0_i32_1 = arith.constant 0 : i32
    return %c0_i32, %c0_i32_0 : i32, i32
  }
  func.func @transform_14(%arg0: i32) -> (i32, i32) {
    %c0_i32 = arith.constant 0 : i32
    %c0_i32_0 = arith.constant 0 : i32
    return %arg0, %c0_i32 : i32, i32
  }
}

</mosaic_0001>

<llo_original>
// kernel: tpu_custom_call.1
$region0: #{tpu_custom_call.1}
  #allocation0 [shape = 'u32[]', space=smem, size = 0x4, offset = 0x4, fixed_abs, tag = 'smem constant byte address 0x4 - core index']
  #allocation1 [shape = 'u32[72,128]{1,0:T(1,128)}', space=vmem, size = 0x9000, scoped, tag = 'internal scratch']
  %s0 = inlined_call_operand.vmem [shape: f32[8,32], index: 0, kind: input, shape index: {}]
  %s1 = inlined_call_operand.hbm [shape: f32[8,32], index: 1, kind: input, shape index: {}]
  %s2 = inlined_call_operand.hbm [shape: f32[8,32], index: 2, kind: input, shape index: {}]
  %s3 = inlined_call_operand.vmem [shape: f32[32,32], index: 3, kind: input, shape index: {}]
  %s4 = inlined_call_operand.vmem [shape: f32[1,32], index: 4, kind: input, shape index: {}]
  %s5 = inlined_call_operand.vmem [shape: f32[32,4], index: 5, kind: input, shape index: {}]
  %s6 = inlined_call_operand.vmem [shape: f32[2,32], index: 6, kind: input, shape index: {}]
  %s7 = inlined_call_operand.vmem [shape: f32[32,64], index: 7, kind: input, shape index: {}]
  %s8 = inlined_call_operand.vmem [shape: f32[32,64], index: 8, kind: input, shape index: {}]
  %s9 = inlined_call_operand.vmem [shape: f32[1,64], index: 9, kind: input, shape index: {}]
  %s10 = inlined_call_operand.vmem [shape: f32[64,32], index: 10, kind: input, shape index: {}]
  %s11 = inlined_call_operand.vmem [shape: f32[1,32], index: 11, kind: input, shape index: {}]
  %s12 = inlined_call_operand.hbm [shape: f32[32,128], index: 12, kind: input, shape index: {}]
  %s13 = inlined_call_operand.vmem [shape: f32[1,128], index: 13, kind: input, shape index: {}]
  %s14 = inlined_call_operand.hbm [shape: f32[8,128], index: 14, kind: output, shape index: {}]
  %s15 = sld [smem:[#allocation0]]
  $region78: #{tpu_custom_call.1} parent=0
    _
  %s17 = ssub.s32 1, %s15
  %s18 = scalar_select 0, %s17, %s15
  $region1: #{tpu_custom_call.1} parent=0
    #allocation2 [shape = 'u8[4096]{0}', space=vmem, size = 0x1000, scoped, tag = 'input window, operand 1, single buffered']
    #allocation3 [shape = 's32[1]{0}', space=sflag, size = 0x4, scoped, tag = 'scoped memory for tpu_custom_call.1']
    #allocation4 [shape = 's32[1]{0}', space=sflag, size = 0x4, scoped, tag = 'scoped memory for tpu_custom_call.1']
    #allocation5 [shape = 'u8[4096]{0}', space=vmem, size = 0x1000, scoped, tag = 'input window, operand 2, single buffered']
    #allocation6 [shape = 's32[1]{0}', space=sflag, size = 0x4, scoped, tag = 'scoped memory for tpu_custom_call.1']
    #allocation7 [shape = 'u8[16384]{0}', space=vmem, size = 0x4000, scoped, tag = 'input window, operand 12, single buffered']
    #allocation8 [shape = 'u8[4096]{0}', space=vmem, size = 0x1000, scoped, tag = 'output window, operand 0, single buffered']
    %19 = vsyncpa [#allocation3], 0
    %20 = vsyncpa [#allocation6], 0
    %21 = vsyncpa [#allocation4], 0
    // Predicated region
    $region2: #{tpu_custom_call.1} parent=1 // pred_check
      _
    $region3: #{tpu_custom_call.1} parent=1 // pred_check_branch
      %23 = sbr.rel (0) target = $region5
    $region4: #{tpu_custom_call.1} parent=1 // pred_region
      _
    $region5: #{tpu_custom_call.1} parent=1 // pred_fallthru
      _
    // Predicated region
    $region6: #{tpu_custom_call.1} parent=1 // pred_check
      _
    $region7: #{tpu_custom_call.1} parent=1 // pred_check_branch
      %25 = sbr.rel (0) target = $region9
    $region8: #{tpu_custom_call.1} parent=1 // pred_region
      %27 = vsyncadd [#allocation3], 0
      %s29 = sshll.u32 %s1, 4
      %s30 = int_to_ptr.hbm [resolvable:$true] %s29
      %s31 = sshll.u32 [#allocation2], 4
      %s32 = int_to_ptr.vmem [resolvable:$true] %s31
      %34 = dma.hbm_to_vmem [thread:$0]  %s30, 128, %s32, [#allocation3]
    $region9: #{tpu_custom_call.1} parent=1 // pred_fallthru
      _
    // Predicated region
    $region10: #{tpu_custom_call.1} parent=1 // pred_check
      _
    $region11: #{tpu_custom_call.1} parent=1 // pred_check_branch
      %36 = sbr.rel (0) target = $region13
    $region12: #{tpu_custom_call.1} parent=1 // pred_region
      %38 = vsyncadd [#allocation6], 0
      %s40 = sshll.u32 %s2, 4
      %s41 = int_to_ptr.hbm [resolvable:$true] %s40
      %s42 = sshll.u32 [#allocation5], 4
      %s43 = int_to_ptr.vmem [resolvable:$true] %s42
      %45 = dma.hbm_to_vmem [thread:$0]  %s41, 128, %s43, [#allocation6]
    $region13: #{tpu_custom_call.1} parent=1 // pred_fallthru
      _
    // Predicated region
    $region14: #{tpu_custom_call.1} parent=1 // pred_check
      _
    $region15: #{tpu_custom_call.1} parent=1 // pred_check_branch
      %47 = sbr.rel (0) target = $region17
    $region16: #{tpu_custom_call.1} parent=1 // pred_region
      _
    $region17: #{tpu_custom_call.1} parent=1 // pred_fallthru
      _
    // Predicated region
    $region18: #{tpu_custom_call.1} parent=1 // pred_check
      _
    $region19: #{tpu_custom_call.1} parent=1 // pred_check_branch
      %49 = sbr.rel (0) target = $region21
    $region20: #{tpu_custom_call.1} parent=1 // pred_region
      _
    $region21: #{tpu_custom_call.1} parent=1 // pred_fallthru
      _
    // Predicated region
    $region22: #{tpu_custom_call.1} parent=1 // pred_check
      _
    $region23: #{tpu_custom_call.1} parent=1 // pred_check_branch
      %51 = sbr.rel (0) target = $region25
    $region24: #{tpu_custom_call.1} parent=1 // pred_region
      _
    $region25: #{tpu_custom_call.1} parent=1 // pred_fallthru
      _
    // Predicated region
    $region26: #{tpu_custom_call.1} parent=1 // pred_check
      _
    $region27: #{tpu_custom_call.1} parent=1 // pred_check_branch
      %53 = sbr.rel (0) target = $region29
    $region28: #{tpu_custom_call.1} parent=1 // pred_region
      _
    $region29: #{tpu_custom_call.1} parent=1 // pred_fallthru
      _
    // Predicated region
    $region30: #{tpu_custom_call.1} parent=1 // pred_check
      _
    $region31: #{tpu_custom_call.1} parent=1 // pred_check_branch
      %55 = sbr.rel (0) target = $region33
    $region32: #{tpu_custom_call.1} parent=1 // pred_region
      _
    $region33: #{tpu_custom_call.1} parent=1 // pred_fallthru
      _
    // Predicated region
    $region34: #{tpu_custom_call.1} parent=1 // pred_check
      _
    $region35: #{tpu_custom_call.1} parent=1 // pred_check_branch
      %57 = sbr.rel (0) target = $region37
    $region36: #{tpu_custom_call.1} parent=1 // pred_region
      _
    $region37: #{tpu_custom_call.1} parent=1 // pred_fallthru
      _
    // Predicated region
    $region38: #{tpu_custom_call.1} parent=1 // pred_check
      _
    $region39: #{tpu_custom_call.1} parent=1 // pred_check_branch
      %59 = sbr.rel (0) target = $region41
    $region40: #{tpu_custom_call.1} parent=1 // pred_region
      _
    $region41: #{tpu_custom_call.1} parent=1 // pred_fallthru
      _
    // Predicated region
    $region42: #{tpu_custom_call.1} parent=1 // pred_check
      _
    $region43: #{tpu_custom_call.1} parent=1 // pred_check_branch
      %61 = sbr.rel (0) target = $region45
    $region44: #{tpu_custom_call.1} parent=1 // pred_region
      _
    $region45: #{tpu_custom_call.1} parent=1 // pred_fallthru
      _
    // Predicated region
    $region46: #{tpu_custom_call.1} parent=1 // pred_check
      _
    $region47: #{tpu_custom_call.1} parent=1 // pred_check_branch
      %63 = sbr.rel (0) target = $region49
    $region48: #{tpu_custom_call.1} parent=1 // pred_region
      _
    $region49: #{tpu_custom_call.1} parent=1 // pred_fallthru
      _
    // Predicated region
    $region50: #{tpu_custom_call.1} parent=1 // pred_check
      _
    $region51: #{tpu_custom_call.1} parent=1 // pred_check_branch
      %65 = sbr.rel (0) target = $region53
    $region52: #{tpu_custom_call.1} parent=1 // pred_region
      %67 = vsyncadd [#allocation6], 0
      %s68 = sshll.u32 %s12, 4
      %s69 = int_to_ptr.hbm [resolvable:$true] %s68
      %s70 = sshll.u32 [#allocation7], 4
      %s71 = int_to_ptr.vmem [resolvable:$true] %s70
      %76 = dma.hbm_to_vmem [thread:$0]  %s69, 512, %s71, [#allocation6], 128, 128, 8
    $region53: #{tpu_custom_call.1} parent=1 // pred_fallthru
      _
    // Predicated region
    $region54: #{tpu_custom_call.1} parent=1 // pred_check
      _
    $region55: #{tpu_custom_call.1} parent=1 // pred_check_branch
      %78 = sbr.rel (0) target = $region57
    $region56: #{tpu_custom_call.1} parent=1 // pred_region
      _
    $region57: #{tpu_custom_call.1} parent=1 // pred_fallthru
      _
    // Predicated region
    $region58: #{tpu_custom_call.1} parent=1 // pred_check
      _
    $region59: #{tpu_custom_call.1} parent=1 // pred_check_branch
      %80 = sbr.rel (0) target = $region61
    $region60: #{tpu_custom_call.1} parent=1 // pred_region
      %82 = dma.done [#allocation3], 128
    $region61: #{tpu_custom_call.1} parent=1 // pred_fallthru
      _
    // Predicated region
    $region62: #{tpu_custom_call.1} parent=1 // pred_check
      _
    $region63: #{tpu_custom_call.1} parent=1 // pred_check_branch
      %84 = sbr.rel (0) target = $region65
    $region64: #{tpu_custom_call.1} parent=1 // pred_region
      %86 = dma.done [#allocation6], 128
    $region65: #{tpu_custom_call.1} parent=1 // pred_fallthru
      _
    // Predicated region
    $region66: #{tpu_custom_call.1} parent=1 // pred_check
      _
    $region67: #{tpu_custom_call.1} parent=1 // pred_check_branch
      %88 = sbr.rel (0) target = $region69
    $region68: #{tpu_custom_call.1} parent=1 // pred_region
      %90 = dma.done [#allocation6], 512
    $region69: #{tpu_custom_call.1} parent=1 // pred_fallthru
      _
    %v91 = vld [vmem:[%s3] sm:$0xff]
    %v92 = vld [vmem:[%s3 + $0x8] sm:$0xff]
    %v93 = vld [vmem:[%s3 + $0x10] sm:$0xff]
    %v94 = vld [vmem:[%s3 + $0x18] sm:$0xff]
    %v95 = vld [vmem:[%s4] sm:$0x1]
    %v96 = vld [vmem:[%s5] sm:$0xff]
    %v97 = vld [vmem:[%s5 + $0x8] sm:$0xff]
    %v98 = vld [vmem:[%s5 + $0x10] sm:$0xff]
    %v99 = vld [vmem:[%s5 + $0x18] sm:$0xff]
    %v100 = vld [vmem:[%s6] sm:$0x1]
    %v101 = vld [vmem:[%s6 + $0x1] sm:$0x1]
    %v102 = vld [vmem:[%s0] sm:$0xff]
    %v103 = vld [vmem:[#allocation2] sm:$0xff]
    %v104 = vld [vmem:[#allocation5] sm:$0xff]
    %v106 = vperm.slane %v95, 0
    %vm108 = vcmask 261120
    %v110 = vsel %vm108, %v102, 0
    %112 = vmatpush.msra.mxu0 0.0
    %113 = vmatpush.msra.mxu0 0.0
    %114 = vmatpush.msra.mxu0 0.0
    %115 = vmatpush.msra.mxu0 0.0
    %116 = vmatpush.msra.mxu0 0.0
    %117 = vmatpush.msra.mxu0 0.0
    %118 = vmatpush.msra.mxu0 0.0
    %119 = vmatpush.msra.mxu0 0.0
    %120 = vmatpush.msra.mxu0 0.0
    %121 = vmatpush.msra.mxu0 0.0
    %122 = vmatpush.msra.mxu0 0.0
    %123 = vmatpush.msra.mxu0 0.0
    %124 = vmatpush.msra.mxu0 %v94
    %125 = vmatpush.msra.mxu0 %v93
    %126 = vmatpush.msra.mxu0 %v92
    %127 = vmatpush.msra.mxu0 %v91
    %128 = vmatmul.f32.gmra.mxu0 %v110
    %v129 = vpop.f32.mrf.mxu0
    %v130 = vadd.f32 %v106, %v129
    %131 = vdwg.mxu0
    %v132 = vmax.f32 %v130, 0.0
    %v134 = vsel %vm108, %v104, 0
    %v137 = vsel %vm108, %v103, 0
    %139 = vmatpush.msra.mxu0 0.0
    %140 = vmatpush.msra.mxu0 0.0
    %141 = vmatpush.msra.mxu0 0.0
    %142 = vmatpush.msra.mxu0 0.0
    %143 = vmatpush.msra.mxu0 0.0
    %144 = vmatpush.msra.mxu0 0.0
    %145 = vmatpush.msra.mxu0 0.0
    %146 = vmatpush.msra.mxu0 0.0
    %147 = vmatpush.msra.mxu0 0.0
    %148 = vmatpush.msra.mxu0 0.0
    %149 = vmatpush.msra.mxu0 0.0
    %150 = vmatpush.msra.mxu0 0.0
    %151 = vmatpush.msra.mxu0 %v99
    %152 = vmatpush.msra.mxu0 %v98
    %153 = vmatpush.msra.mxu0 %v97
    %154 = vmatpush.msra.mxu0 %v96
    %155 = vmatmul.f32.gmra.mxu0 %v134
    %v156 = vpop.f32.mrf.mxu0
    %v157 = vadd.f32 0.0, %v156
    %158 = vmatmul.f32.gmra.mxu0 %v137
    %v159 = vpop.f32.mrf.mxu0
    %v160 = vadd.f32 0.0, %v159
    %161 = vdwg.mxu0
    %163 = vset.pattern.permute.xlu0 0
    %164 = vperm.xlu0 %163, %v157
    %v165 = vpop.permute.xlu0 %164
    %v167 = vmul.f32 %v103, %v165
    %169 = vset.pattern.permute.xlu0 1
    %170 = vperm.xlu0 %169, %v160
    %v171 = vpop.permute.xlu0 %170
    %v173 = vmul.f32 %v104, %v171
    %v174 = vadd.f32 %v167, %v173
    %v175 = vperm.slane %v100, 0
    %v176 = vadd.f32 %v174, %v175
    %177 = vset.pattern.permute.xlu0 2
    %178 = vperm.xlu0 %177, %v157
    %v179 = vpop.permute.xlu0 %178
    %v181 = vmul.f32 %v103, %v179
    %182 = vset.pattern.permute.xlu0 3
    %183 = vperm.xlu0 %182, %v160
    %v184 = vpop.permute.xlu0 %183
    %v186 = vmul.f32 %v104, %v184
    %v187 = vadd.f32 %v181, %v186
    %v188 = vperm.slane %v101, 0
    %v189 = vadd.f32 %v187, %v188
    %v191 = vsel %vm108, %v132, 0
    %193 = vmatpush.msra.mxu0 0.0
    %194 = vmatpush.msra.mxu0 0.0
    %195 = vmatpush.msra.mxu0 0.0
    %196 = vmatpush.msra.mxu0 0.0
    %197 = vmatpush.msra.mxu0 0.0
    %198 = vmatpush.msra.mxu0 0.0
    %199 = vmatpush.msra.mxu0 0.0
    %200 = vmatpush.msra.mxu0 0.0
    %201 = vmatpush.msra.mxu0 0.0
    %202 = vmatpush.msra.mxu0 0.0
    %203 = vmatpush.msra.mxu0 0.0
    %204 = vmatpush.msra.mxu0 0.0
    %205 = vmatpush.msra.mxu0 %v94
    %206 = vmatpush.msra.mxu0 %v93
    %207 = vmatpush.msra.mxu0 %v92
    %208 = vmatpush.msra.mxu0 %v91
    %209 = vmatmul.f32.gmra.mxu0 %v191
    %v210 = vpop.f32.mrf.mxu0
    %v211 = vadd.f32 %v106, %v210
    %212 = vdwg.mxu0
    %v213 = vmax.f32 %v211, 0.0
    %v215 = vsel %vm108, %v189, 0
    %v218 = vsel %vm108, %v176, 0
    %220 = vmatpush.msra.mxu0 0.0
    %221 = vmatpush.msra.mxu0 0.0
    %222 = vmatpush.msra.mxu0 0.0
    %223 = vmatpush.msra.mxu0 0.0
    %224 = vmatpush.msra.mxu0 0.0
    %225 = vmatpush.msra.mxu0 0.0
    %226 = vmatpush.msra.mxu0 0.0
    %227 = vmatpush.msra.mxu0 0.0
    %228 = vmatpush.msra.mxu0 0.0
    %229 = vmatpush.msra.mxu0 0.0
    %230 = vmatpush.msra.mxu0 0.0
    %231 = vmatpush.msra.mxu0 0.0
    %232 = vmatpush.msra.mxu0 %v99
    %233 = vmatpush.msra.mxu0 %v98
    %234 = vmatpush.msra.mxu0 %v97
    %235 = vmatpush.msra.mxu0 %v96
    %236 = vmatmul.f32.gmra.mxu0 %v215
    %v237 = vpop.f32.mrf.mxu0
    %v238 = vadd.f32 0.0, %v237
    %239 = vmatmul.f32.gmra.mxu0 %v218
    %v240 = vpop.f32.mrf.mxu0
    %v241 = vadd.f32 0.0, %v240
    %242 = vdwg.mxu0
    %244 = vset.pattern.permute.xlu0 0
    %245 = vperm.xlu0 %244, %v238
    %v246 = vpop.permute.xlu0 %245
    %v248 = vmul.f32 %v176, %v246
    %250 = vset.pattern.permute.xlu0 1
    %251 = vperm.xlu0 %250, %v241
    %v252 = vpop.permute.xlu0 %251
    %v254 = vmul.f32 %v189, %v252
    %v255 = vadd.f32 %v248, %v254
    %v256 = vadd.f32 %v255, %v175
    %v257 = vld [vmem:[%s7] sm:$0xff]
    %v258 = vld [vmem:[%s7 + $0x8] sm:$0xff]
    %v259 = vld [vmem:[%s7 + $0x10] sm:$0xff]
    %v260 = vld [vmem:[%s7 + $0x18] sm:$0xff]
    %v261 = vld [vmem:[%s8] sm:$0xff]
    %v262 = vld [vmem:[%s8 + $0x8] sm:$0xff]
    %v263 = vld [vmem:[%s8 + $0x10] sm:$0xff]
    %v264 = vld [vmem:[%s8 + $0x18] sm:$0xff]
    %v266 = vsel %vm108, %v256, 0
    %268 = vmatpush.msra.mxu0 0.0
    %269 = vmatpush.msra.mxu0 0.0
    %270 = vmatpush.msra.mxu0 0.0
    %271 = vmatpush.msra.mxu0 0.0
    %272 = vmatpush.msra.mxu0 0.0
    %273 = vmatpush.msra.mxu0 0.0
    %274 = vmatpush.msra.mxu0 0.0
    %275 = vmatpush.msra.mxu0 0.0
    %276 = vmatpush.msra.mxu0 0.0
    %277 = vmatpush.msra.mxu0 0.0
    %278 = vmatpush.msra.mxu0 0.0
    %279 = vmatpush.msra.mxu0 0.0
    %280 = vmatpush.msra.mxu0 %v264
    %281 = vmatpush.msra.mxu0 %v263
    %282 = vmatpush.msra.mxu0 %v262
    %283 = vmatpush.msra.mxu0 %v261
    %284 = vmatmul.f32.gmra.mxu0 %v266
    %v285 = vpop.f32.mrf.mxu0
    %v286 = vadd.f32 0.0, %v285
    %287 = vdwg.mxu0
    %v289 = vsel %vm108, %v213, 0
    %291 = vmatpush.msra.mxu0 0.0
    %292 = vmatpush.msra.mxu0 0.0
    %293 = vmatpush.msra.mxu0 0.0
    %294 = vmatpush.msra.mxu0 0.0
    %295 = vmatpush.msra.mxu0 0.0
    %296 = vmatpush.msra.mxu0 0.0
    %297 = vmatpush.msra.mxu0 0.0
    %298 = vmatpush.msra.mxu0 0.0
    %299 = vmatpush.msra.mxu0 0.0
    %300 = vmatpush.msra.mxu0 0.0
    %301 = vmatpush.msra.mxu0 0.0
    %302 = vmatpush.msra.mxu0 0.0
    %303 = vmatpush.msra.mxu0 %v260
    %304 = vmatpush.msra.mxu0 %v259
    %305 = vmatpush.msra.mxu0 %v258
    %306 = vmatpush.msra.mxu0 %v257
    %307 = vmatmul.f32.gmra.mxu0 %v289
    %v308 = vpop.f32.mrf.mxu0
    %v309 = vadd.f32 %v286, %v308
    %310 = vdwg.mxu0
    %v311 = vld [vmem:[%s9] sm:$0x1]
    %v313 = vperm.slane %v311, 0
    %v315 = vadd.f32 %v309, %v313
    %v316 = vmax.f32 %v315, 0.0
    %v317 = vld [vmem:[%s10] sm:$0xff]
    %v318 = vld [vmem:[%s10 + $0x8] sm:$0xff]
    %v319 = vld [vmem:[%s10 + $0x10] sm:$0xff]
    %v320 = vld [vmem:[%s10 + $0x18] sm:$0xff]
    %v321 = vld [vmem:[%s10 + $0x20] sm:$0xff]
    %v322 = vld [vmem:[%s10 + $0x28] sm:$0xff]
    %v323 = vld [vmem:[%s10 + $0x30] sm:$0xff]
    %v324 = vld [vmem:[%s10 + $0x38] sm:$0xff]
    %v325 = vld [vmem:[%s11] sm:$0x1]
    %v327 = vperm.slane %v325, 0
    %vm329 = vcmask 523264
    %v331 = vsel %vm329, %v316, 0
    %333 = vmatpush.msra.mxu0 0.0
    %334 = vmatpush.msra.mxu0 0.0
    %335 = vmatpush.msra.mxu0 0.0
    %336 = vmatpush.msra.mxu0 0.0
    %337 = vmatpush.msra.mxu0 0.0
    %338 = vmatpush.msra.mxu0 0.0
    %339 = vmatpush.msra.mxu0 0.0
    %340 = vmatpush.msra.mxu0 0.0
    %341 = vmatpush.msra.mxu0 %v324
    %342 = vmatpush.msra.mxu0 %v323
    %343 = vmatpush.msra.mxu0 %v322
    %344 = vmatpush.msra.mxu0 %v321
    %345 = vmatpush.msra.mxu0 %v320
    %346 = vmatpush.msra.mxu0 %v319
    %347 = vmatpush.msra.mxu0 %v318
    %348 = vmatpush.msra.mxu0 %v317
    %349 = vmatmul.f32.gmra.mxu0 %v331
    %v350 = vpop.f32.mrf.mxu0
    %v351 = vadd.f32 %v327, %v350
    %352 = vdwg.mxu0
    %v353 = vmax.f32 %v351, 0.0
    %v354 = vld [vmem:[#allocation7] sm:$0xff]
    %v355 = vld [vmem:[#allocation7 + $0x8] sm:$0xff]
    %v356 = vld [vmem:[#allocation7 + $0x10] sm:$0xff]
    %v357 = vld [vmem:[#allocation7 + $0x18] sm:$0xff]
    %v358 = vld [vmem:[%s13] sm:$0x1]
    %v360 = vperm.slane %v358, 0
    %v363 = vsel %vm108, %v353, 0
    %365 = vmatpush.msra.mxu0 0.0
    %366 = vmatpush.msra.mxu0 0.0
    %367 = vmatpush.msra.mxu0 0.0
    %368 = vmatpush.msra.mxu0 0.0
    %369 = vmatpush.msra.mxu0 0.0
    %370 = vmatpush.msra.mxu0 0.0
    %371 = vmatpush.msra.mxu0 0.0
    %372 = vmatpush.msra.mxu0 0.0
    %373 = vmatpush.msra.mxu0 0.0
    %374 = vmatpush.msra.mxu0 0.0
    %375 = vmatpush.msra.mxu0 0.0
    %376 = vmatpush.msra.mxu0 0.0
    %377 = vmatpush.msra.mxu0 %v357
    %378 = vmatpush.msra.mxu0 %v356
    %379 = vmatpush.msra.mxu0 %v355
    %380 = vmatpush.msra.mxu0 %v354
    %381 = vmatmul.f32.gmra.mxu0 %v363
    %v382 = vpop.f32.mrf.mxu0
    %v383 = vadd.f32 %v360, %v382
    %384 = vdwg.mxu0
    %v385 = vmax.f32 %v383, 0.0
    %386 = vst [vmem:[#allocation8] sm:$0xff] %v385
    // Predicated region
    $region70: #{tpu_custom_call.1} parent=1 // pred_check
      _
    $region71: #{tpu_custom_call.1} parent=1 // pred_check_branch
      %388 = sbr.rel (0) target = $region73
    $region72: #{tpu_custom_call.1} parent=1 // pred_region
      %390 = vsyncadd [#allocation4], 0
      %s392 = sshll.u32 [#allocation8], 4
      %s393 = int_to_ptr.vmem [resolvable:$true] %s392
      %s394 = sshll.u32 %s14, 4
      %s395 = int_to_ptr.hbm [resolvable:$true] %s394
      %397 = dma.vmem_to_hbm [thread:$0]  %s393, 128, %s395, [#allocation4]
    $region73: #{tpu_custom_call.1} parent=1 // pred_fallthru
      _
    // Predicated region
    $region74: #{tpu_custom_call.1} parent=1 // pred_check
      _
    $region75: #{tpu_custom_call.1} parent=1 // pred_check_branch
      %399 = sbr.rel (0) target = $region77
    $region76: #{tpu_custom_call.1} parent=1 // pred_region
      %401 = dma.done [#allocation4], 128
    $region77: #{tpu_custom_call.1} parent=1 // pred_fallthru
      _
    %402 = vsyncpa [#allocation3], 1
    %403 = vsyncpa [#allocation6], 1
    %404 = vsyncpa [#allocation4], 1

</llo_original>
